<compile_context>
chip_gen: v5e
topology: v5e:2x2
jax: 0.10.0
libtpu: 0.0.40
codegen_flags: <defaults>
</compile_context>

<pallas_src>
import functools

import jax
import jax.numpy as jnp
from jax import lax
from jax.experimental import pallas as pl
from jax.experimental.pallas import tpu as pltpu


# Contract x's dim 1 with w's dim 1 (i.e. x @ w.T) without an explicit
# transpose — Mosaic folds this straight into the MXU matmul.
_XT_W_DIMS = (((1,), (1,)), ((), ()))

# Conservative VMEM budget used for tile sizing: fits v5e's 16 MiB scoped
# default (the smallest across generations) with headroom; v6e/v7x have more,
# so this never over-commits on any generation.
_VMEM_TILE_BUDGET = 12 * 1024 * 1024


def _cost_estimate(B, D_in, D_out, in_bytes, out_bytes):
    return pl.CostEstimate(
        flops=2 * B * D_in * D_out,
        transcendentals=0,
        bytes_accessed=in_bytes * (B * D_in + D_in * D_out) + out_bytes * B * D_out,
    )


# ---------------------------------------------------------------------------
# Kernels
# ---------------------------------------------------------------------------

def _matmul_xt_kernel(x_ref, w_ref, o_ref):
    """Whole-tile y = x @ w.T.  Used gridless and for the K-grid==1 tiled path.

    No accumulator scratch, no pl.when init/finalize.
    """
    o_ref[...] = lax.dot_general(
        x_ref[...],
        w_ref[...],
        dimension_numbers=_XT_W_DIMS,
        preferred_element_type=jnp.float32,
    ).astype(o_ref.dtype)


def _matmul_xt_acc_out_kernel(x_ref, w_ref, o_ref):
    """K-split path, f32 output: accumulate directly into o_ref (no scratch)."""
    @pl.when(pl.program_id(2) == 0)
    def _():
        o_ref[...] = jnp.zeros_like(o_ref)

    o_ref[...] += lax.dot_general(
        x_ref[...],
        w_ref[...],
        dimension_numbers=_XT_W_DIMS,
        preferred_element_type=jnp.float32,
    )


def _matmul_xt_acc_scratch_kernel(x_ref, w_ref, o_ref, acc_ref):
    """K-split path, non-f32 output: keep an f32 VMEM accumulator."""
    @pl.when(pl.program_id(2) == 0)
    def _():
        acc_ref[...] = jnp.zeros_like(acc_ref)

    acc_ref[...] += lax.dot_general(
        x_ref[...],
        w_ref[...],
        dimension_numbers=_XT_W_DIMS,
        preferred_element_type=jnp.float32,
    )

    @pl.when(pl.program_id(2) == pl.num_programs(2) - 1)
    def _():
        o_ref[...] = acc_ref[...].astype(o_ref.dtype)


# ---------------------------------------------------------------------------
# Paths
# ---------------------------------------------------------------------------

def _linear_small(x, w, out_dtype):
    """Gridless whole-array kernel for tiny / irregular shapes.

    Pads the output dim to a multiple of 128 (unmasked lane-dense stores) and
    the batch to a multiple of 8 (full sublanes), then slices back.
    """
    B, D_in = x.shape
    D_out = w.shape[0]
    B_pad = -(-B // 8) * 8
    N_pad = -(-D_out // 128) * 128
    x_p = x if B_pad == B else jnp.pad(x, ((0, B_pad - B), (0, 0)))
    w_p = w if N_pad == D_out else jnp.pad(w, ((0, N_pad - D_out), (0, 0)))

    y = pl.pallas_call(
        _matmul_xt_kernel,
        out_shape=jax.ShapeDtypeStruct((B_pad, N_pad), out_dtype),
        in_specs=[
            pl.BlockSpec(memory_space=pltpu.MemorySpace.VMEM),
            pl.BlockSpec(memory_space=pltpu.MemorySpace.VMEM),
        ],
        out_specs=pl.BlockSpec(memory_space=pltpu.MemorySpace.VMEM),
        cost_estimate=_cost_estimate(
            B_pad, D_in, N_pad,
            jnp.dtype(x.dtype).itemsize, jnp.dtype(out_dtype).itemsize),
    )(x_p, w_p)

    if B_pad != B or N_pad != D_out:
        y = y[:B, :D_out]
    return y


def _tiled_vmem_bytes(tm, tn, tk, in_item, out_item, need_acc):
    # BlockSpec double-buffers each input / output tile; add the f32 scratch
    # accumulator only when it is actually allocated.
    b = 2 * (tm + tn) * tk * in_item + 2 * tm * tn * out_item
    if need_acc:
        b += tm * tn * 4
    return b


def _pick_tiles(B, D_in, D_out, in_item, out_item, out_is_f32):
    """Pick (tm, tn, tk); None -> fall back to the gridless small path."""
    if B % 8 != 0:
        return None
    tm_cands = [t for t in (1024, 512, 256, 128, 64, 32, 16, 8) if B % t == 0]
    if not tm_cands:
        return None
    # Prefer a single K tile (drops the accumulator entirely) and the full
    # output width; shrink only if the VMEM budget forces it.
    tk_cands = [D_in] + [t for t in (512, 256, 128) if t < D_in and D_in % t == 0]
    tn_cands = [D_out] + [t for t in (512, 256, 128) if t < D_out and D_out % t == 0]

    for tk in tk_cands:
        for tn in tn_cands:
            need_acc = (tk < D_in) and not out_is_f32
            # Prefer >=4 M-steps (>=2 per TensorCore on v7x) so the x DMA is
            # hidden by the pipeline, but keep tm as large as possible.
            for min_steps in (4, 2, 1):
                for tm in tm_cands:
                    if B // tm < min_steps:
                        continue
                    if _tiled_vmem_bytes(tm, tn, tk, in_item, out_item,
                                         need_acc) <= _VMEM_TILE_BUDGET:
                        return (tm, tn, tk)
    return None


def _linear_tiled(x, w, out_dtype, tm, tn, tk):
    B, D_in = x.shape
    D_out = w.shape[0]
    assert B % tm == 0 and D_out % tn == 0 and D_in % tk == 0
    gm, gn, gk = B // tm, D_out // tn, D_in // tk
    cost = _cost_estimate(B, D_in, D_out,
                          jnp.dtype(x.dtype).itemsize,
                          jnp.dtype(out_dtype).itemsize)

    if gk == 1:
        # K fits a single tile: plain write, no accumulator, no branches.
        return pl.pallas_call(
            _matmul_xt_kernel,
            out_shape=jax.ShapeDtypeStruct((B, D_out), out_dtype),
            grid_spec=pltpu.PrefetchScalarGridSpec(
                num_scalar_prefetch=0,
                grid=(gm, gn),
                in_specs=[
                    pl.BlockSpec((tm, tk), lambda i, j: (i, 0)),
                    pl.BlockSpec((tn, tk), lambda i, j: (j, 0)),
                ],
                out_specs=pl.BlockSpec((tm, tn), lambda i, j: (i, j)),
            ),
            compiler_params=pltpu.CompilerParams(
                dimension_semantics=("parallel", "parallel")),
            cost_estimate=cost,
        )(x, w)

    # K is split across the innermost ("arbitrary") grid axis.
    if jnp.dtype(out_dtype) == jnp.float32:
        kernel = _matmul_xt_acc_out_kernel   # accumulate directly into o_ref
        scratch = []
    else:
        kernel = _matmul_xt_acc_scratch_kernel
        scratch = [pltpu.VMEM((tm, tn), jnp.float32)]

    return pl.pallas_call(
        kernel,
        out_shape=jax.ShapeDtypeStruct((B, D_out), out_dtype),
        grid_spec=pltpu.PrefetchScalarGridSpec(
            num_scalar_prefetch=0,
            grid=(gm, gn, gk),
            in_specs=[
                pl.BlockSpec((tm, tk), lambda i, j, k: (i, k)),
                pl.BlockSpec((tn, tk), lambda i, j, k: (j, k)),
            ],
            out_specs=pl.BlockSpec((tm, tn), lambda i, j, k: (i, j)),
            scratch_shapes=scratch,
        ),
        compiler_params=pltpu.CompilerParams(
            # K is the accumulation axis: must stay innermost + "arbitrary".
            dimension_semantics=("parallel", "parallel", "arbitrary")),
        cost_estimate=cost,
    )(x, w)


# ---------------------------------------------------------------------------
# Public entry point
# ---------------------------------------------------------------------------

@functools.partial(jax.jit, static_argnames=("compute_dtype", "tile_override"))
def simple_net_forward(x, weight, *, compute_dtype=None, tile_override=None):
    """Pallas implementation of SimpleNet.forward: y = x @ weight.T (no bias).

    x: (batch, 2*num_clusters), weight: (2*num_clusters, 2*num_clusters).
    compute_dtype=jnp.bfloat16 halves streamed bytes and uses the native bf16
    MXU (f32 accumulation / output is preserved).
    """
    B, D_in = x.shape
    D_out, D_in_w = weight.shape
    assert D_in == D_in_w, "weight must be (out_features, in_features)"
    out_dtype = x.dtype

    if compute_dtype is not None and jnp.dtype(compute_dtype) != jnp.dtype(x.dtype):
        xc = x.astype(compute_dtype)
        wc = weight.astype(compute_dtype)
    else:
        xc, wc = x, weight

    in_item = jnp.dtype(xc.dtype).itemsize
    out_item = jnp.dtype(out_dtype).itemsize
    out_is_f32 = jnp.dtype(out_dtype) == jnp.float32

    if tile_override is not None:
        tiles = tile_override
    elif B < 256:
        # Too little work to amortize grid steps: single gridless block.
        tiles = None
    else:
        tiles = _pick_tiles(B, D_in, D_out, in_item, out_item, out_is_f32)

    if tiles is None:
        return _linear_small(xc, wc, out_dtype)
    tm, tn, tk = tiles
    return _linear_tiled(xc, wc, out_dtype, tm, tn, tk)


if __name__ == "__main__":
    key = jax.random.PRNGKey(0)
    kx, kw, kx2, kw2 = jax.random.split(key, 4)

    # 1) Real SimpleNet size: num_clusters=16 -> dim 32, batch 8.
    #    Gridless path with lane-dense (128-wide) padded output.
    num_clusters = 16
    dim = 2 * num_clusters
    batch = 8
    x = jax.random.normal(kx, (batch, dim), dtype=jnp.float32)
    w = jax.random.normal(kw, (dim, dim), dtype=jnp.float32) / jnp.sqrt(dim)
    y = simple_net_forward(x, w)
    jax.block_until_ready(y)
    y_ref = x @ w.T
    assert y.shape == (batch, dim)
    assert jnp.allclose(y, y_ref, atol=1e-5, rtol=1e-5)

    # 2) Scaled up (num_clusters=128 -> dim 256, batch 512): tiled one-K path,
    #    tm=128 -> grid (4, 1): >=2 M-steps per TensorCore on v7x, no scratch.
    dim2, batch2 = 256, 512
    x2 = jax.random.normal(kx2, (batch2, dim2), dtype=jnp.float32)
    w2 = jax.random.normal(kw2, (dim2, dim2), dtype=jnp.float32) / jnp.sqrt(dim2)
    y2 = simple_net_forward(x2, w2)
    jax.block_until_ready(y2)
    y2_ref = x2 @ w2.T
    assert y2.shape == (batch2, dim2)
    assert jnp.allclose(y2, y2_ref, atol=1e-3, rtol=1e-3)

    # 3) bf16 compute, f32 output (halves HBM bytes, native bf16 MXU path).
    y2_bf16 = simple_net_forward(x2, w2, compute_dtype=jnp.bfloat16)
    jax.block_until_ready(y2_bf16)
    assert jnp.allclose(y2_bf16, y2_ref, atol=5e-2, rtol=5e-2)

    # 4) Forced K-split: exercises the accumulate-into-output (scratch-free)
    #    K-reduction kernel.
    y2_ks = simple_net_forward(x2, w2, tile_override=(128, 256, 128))
    jax.block_until_ready(y2_ks)
    assert jnp.allclose(y2_ks, y2_ref, atol=1e-3, rtol=1e-3)

    # 5) bf16 in/out with K-split: exercises the f32 scratch-accumulator kernel.
    yb = simple_net_forward(x2.astype(jnp.bfloat16), w2.astype(jnp.bfloat16),
                            tile_override=(128, 256, 128))
    jax.block_until_ready(yb)
    assert yb.dtype == jnp.bfloat16
    assert jnp.allclose(yb.astype(jnp.float32), y2_ref, atol=1e-1, rtol=1e-1)

    print("KERNEL_OK")
</pallas_src>

<mosaic_0001>
module attributes {stable_mosaic.version = 11 : i64} {
  func.func @_matmul_xt_kernel(%arg0: memref<8x32xf32, #tpu.memory_space<vmem>>, %arg1: memref<128x32xf32, #tpu.memory_space<vmem>>, %arg2: memref<8x128xf32, #tpu.memory_space<vmem>>) attributes {dimension_semantics = [], scalar_prefetch = 0 : i64, scratch_operands = 0 : i64, tpu.core_type = #tpu.core_type<tc>} {
    %c0 = arith.constant 0 : index
    %c0_0 = arith.constant 0 : index
    %0 = vector.load %arg0[%c0, %c0_0] : memref<8x32xf32, #tpu.memory_space<vmem>>, vector<8x32xf32>
    %c0_1 = arith.constant 0 : index
    %c0_2 = arith.constant 0 : index
    %1 = vector.load %arg1[%c0_1, %c0_2] : memref<128x32xf32, #tpu.memory_space<vmem>>, vector<128x32xf32>
    %cst = arith.constant dense<0.000000e+00> : vector<8x128xf32>
    %2 = tpu.matmul %0, %1, %cst {dimension_numbers = #tpu.dot_dimension_numbers<[1], [1], [0], [0], [0, 0, 1, 0], [], []>} : vector<8x32xf32>, vector<128x32xf32>, vector<8x128xf32> -> vector<8x128xf32>
    %c0_3 = arith.constant 0 : index
    %c0_4 = arith.constant 0 : index
    %3 = vector.load %arg2[%c0_3, %c0_4] : memref<8x128xf32, #tpu.memory_space<vmem>>, vector<8x128xf32>
    tpu.vector_store %arg2[%c0_3, %c0_4], %2 {strides = array<i32>} : memref<8x128xf32, #tpu.memory_space<vmem>>, vector<8x128xf32>,
    return
  }
}

</mosaic_0001>

<llo_original>
// kernel: simple_net_forward.1
$region0: #{simple_net_forward.1}
  #allocation0 [shape = 'u32[]', space=smem, size = 0x4, offset = 0x4, fixed_abs, tag = 'smem constant byte address 0x4 - core index']
  #allocation1 [shape = 'u32[72,128]{1,0:T(1,128)}', space=vmem, size = 0x9000, scoped, tag = 'internal scratch']
  %s0 = inlined_call_operand.vmem [shape: f32[8,32], index: 0, kind: input, shape index: {}]
  %s1 = inlined_call_operand.vmem [shape: f32[128,32], index: 1, kind: input, shape index: {}]
  %s2 = inlined_call_operand.hbm [shape: f32[8,128], index: 2, kind: output, shape index: {}]
  %s3 = sld [smem:[#allocation0]]
  $region18: #{simple_net_forward.1} parent=0
    _
  %s5 = ssub.s32 1, %s3
  %s6 = scalar_select 0, %s5, %s3
  $region1: #{simple_net_forward.1} parent=0
    #allocation2 [shape = 'u8[4096]{0}', space=vmem, size = 0x1000, scoped, tag = 'output window, operand 0, single buffered']
    #allocation3 [shape = 's32[1]{0}', space=sflag, size = 0x4, scoped, tag = 'scoped memory for simple_net_forward.1']
    %7 = vsyncpa [#allocation3], 0
    // Predicated region
    $region2: #{simple_net_forward.1} parent=1 // pred_check
      _
    $region3: #{simple_net_forward.1} parent=1 // pred_check_branch
      %9 = sbr.rel (0) target = $region5
    $region4: #{simple_net_forward.1} parent=1 // pred_region
      _
    $region5: #{simple_net_forward.1} parent=1 // pred_fallthru
      _
    // Predicated region
    $region6: #{simple_net_forward.1} parent=1 // pred_check
      _
    $region7: #{simple_net_forward.1} parent=1 // pred_check_branch
      %11 = sbr.rel (0) target = $region9
    $region8: #{simple_net_forward.1} parent=1 // pred_region
      _
    $region9: #{simple_net_forward.1} parent=1 // pred_fallthru
      _
    %v12 = vld [vmem:[%s0] sm:$0xff]
    %v13 = vld [vmem:[%s1] sm:$0xff]
    %v14 = vld [vmem:[%s1 + $0x8] sm:$0xff]
    %v15 = vld [vmem:[%s1 + $0x10] sm:$0xff]
    %v16 = vld [vmem:[%s1 + $0x18] sm:$0xff]
    %v17 = vld [vmem:[%s1 + $0x20] sm:$0xff]
    %v18 = vld [vmem:[%s1 + $0x28] sm:$0xff]
    %v19 = vld [vmem:[%s1 + $0x30] sm:$0xff]
    %v20 = vld [vmem:[%s1 + $0x38] sm:$0xff]
    %v21 = vld [vmem:[%s1 + $0x40] sm:$0xff]
    %v22 = vld [vmem:[%s1 + $0x48] sm:$0xff]
    %v23 = vld [vmem:[%s1 + $0x50] sm:$0xff]
    %v24 = vld [vmem:[%s1 + $0x58] sm:$0xff]
    %v25 = vld [vmem:[%s1 + $0x60] sm:$0xff]
    %v26 = vld [vmem:[%s1 + $0x68] sm:$0xff]
    %v27 = vld [vmem:[%s1 + $0x70] sm:$0xff]
    %v28 = vld [vmem:[%s1 + $0x78] sm:$0xff]
    %vm29 = vcmask 261120
    %v31 = vsel %vm29, %v12, 0
    %v34 = vsel %vm29, %v13, 0
    %v37 = vsel %vm29, %v14, 0
    %v40 = vsel %vm29, %v15, 0
    %v43 = vsel %vm29, %v16, 0
    %v46 = vsel %vm29, %v17, 0
    %v49 = vsel %vm29, %v18, 0
    %v52 = vsel %vm29, %v19, 0
    %v55 = vsel %vm29, %v20, 0
    %v58 = vsel %vm29, %v21, 0
    %v61 = vsel %vm29, %v22, 0
    %v64 = vsel %vm29, %v23, 0
    %v67 = vsel %vm29, %v24, 0
    %v70 = vsel %vm29, %v25, 0
    %v73 = vsel %vm29, %v26, 0
    %v76 = vsel %vm29, %v27, 0
    %v79 = vsel %vm29, %v28, 0
    %81 = vmatpush.xpose.msra.mxu0 %v79
    %82 = vmatpush.xpose.msra.mxu0 %v76
    %83 = vmatpush.xpose.msra.mxu0 %v73
    %84 = vmatpush.xpose.msra.mxu0 %v70
    %85 = vmatpush.xpose.msra.mxu0 %v67
    %86 = vmatpush.xpose.msra.mxu0 %v64
    %87 = vmatpush.xpose.msra.mxu0 %v61
    %88 = vmatpush.xpose.msra.mxu0 %v58
    %89 = vmatpush.xpose.msra.mxu0 %v55
    %90 = vmatpush.xpose.msra.mxu0 %v52
    %91 = vmatpush.xpose.msra.mxu0 %v49
    %92 = vmatpush.xpose.msra.mxu0 %v46
    %93 = vmatpush.xpose.msra.mxu0 %v43
    %94 = vmatpush.xpose.msra.mxu0 %v40
    %95 = vmatpush.xpose.msra.mxu0 %v37
    %96 = vmatpush.xpose.msra.mxu0 %v34
    %97 = vmatmul.f32.gmra.mxu0 %v31
    %v98 = vpop.f32.mrf.mxu0
    %v99 = vadd.f32 0.0, %v98
    %100 = vdwg.mxu0
    %101 = vst [vmem:[#allocation2] sm:$0xff] %v99
    // Predicated region
    $region10: #{simple_net_forward.1} parent=1 // pred_check
      _
    $region11: #{simple_net_forward.1} parent=1 // pred_check_branch
      %103 = sbr.rel (0) target = $region13
    $region12: #{simple_net_forward.1} parent=1 // pred_region
      %105 = vsyncadd [#allocation3], 0
      %s107 = sshll.u32 [#allocation2], 4
      %s108 = int_to_ptr.vmem [resolvable:$true] %s107
      %s109 = sshll.u32 %s2, 4
      %s110 = int_to_ptr.hbm [resolvable:$true] %s109
      %112 = dma.vmem_to_hbm [thread:$0]  %s108, 128, %s110, [#allocation3]
    $region13: #{simple_net_forward.1} parent=1 // pred_fallthru
      _
    // Predicated region
    $region14: #{simple_net_forward.1} parent=1 // pred_check
      _
    $region15: #{simple_net_forward.1} parent=1 // pred_check_branch
      %114 = sbr.rel (0) target = $region17
    $region16: #{simple_net_forward.1} parent=1 // pred_region
      %116 = dma.done [#allocation3], 128
    $region17: #{simple_net_forward.1} parent=1 // pred_fallthru
      _
    %117 = vsyncpa [#allocation3], 1

</llo_original>
